<compile_context>
chip_gen: v5e
topology: v5e:2x2
jax: 0.10.0
libtpu: 0.0.40
codegen_flags: <defaults>
</compile_context>

<pallas_src>
import jax
import jax.numpy as jnp
from jax import lax
from jax.experimental import pallas as pl
from jax.experimental.pallas import tpu as pltpu

N, C, H, W = 2, 4, 16, 16
HW = H * W
K = 7                      # kernel_size (7 -> padding 3)
PAD = K // 2


def spatial_attention_kernel(x_ref, t_ref, o_ref):
    # x_ref: (C, N, HW) lane-dense slabs; t_ref: (2*HW, HW) folded stencil; o_ref: (N, HW)
    x = x_ref[...]                               # (C, N, HW)

    # Channel-sum (1/C of the mean is folded into T2D) and channel-max.
    s = x[0]
    m = x[0]
    for c in range(1, C):
        s = s + x[c]
        m = jnp.maximum(m, x[c])

    # Lane-concat [sum | max] -> (N, 2*HW), then ONE MXU matmul realizes the whole
    # 7x7 depthwise conv (with zero padding) + 1x1 pointwise conv.
    sm = jnp.concatenate([s, m], axis=-1)        # (N, 2*HW)
    y = jnp.dot(sm, t_ref[...], preferred_element_type=jnp.float32)   # (N, HW)

    o_ref[...] = (1.0 / (1.0 + jnp.exp(-y))).astype(o_ref.dtype)


def _toeplitz_2d(w77):
    """(K, K) tap weights -> (H*W, H*W) matrix with H- and W-zero-padding baked in.

    T[p_in, p_out] = w77[i_in - i_out + PAD, j_in - j_out + PAD] when both offsets are
    in [0, K), else 0, with p = i*W + j.  So (flat_map @ T) is exactly the padded
    7x7 cross-correlation of the (H, W) map.
    """
    i_in = jnp.arange(H)[:, None, None, None]
    j_in = jnp.arange(W)[None, :, None, None]
    i_out = jnp.arange(H)[None, None, :, None]
    j_out = jnp.arange(W)[None, None, None, :]
    dh = i_in - i_out + PAD
    dw = j_in - j_out + PAD
    valid = (dh >= 0) & (dh < K) & (dw >= 0) & (dw < K)
    taps = w77[jnp.clip(dh, 0, K - 1), jnp.clip(dw, 0, K - 1)]
    return jnp.where(valid, taps, 0.0).reshape(HW, HW).astype(jnp.float32)


def build_packed_weight(w_dw, w_pw):
    """Fold 1/C + grouped 7x7 taps + 1x1 pointwise into one (2*HW, HW) matrix.

    Called once (outside the per-call jit path) when the weights are static.
    """
    wa = w_dw[0, 0] * w_pw[0, 0, 0, 0] / C     # applied to the channel-sum branch
    wm = w_dw[1, 0] * w_pw[0, 1, 0, 0]         # applied to the channel-max branch
    return jnp.concatenate([_toeplitz_2d(wa), _toeplitz_2d(wm)], axis=0)   # (2*HW, HW)


@jax.jit
def spatial_attention_pallas(x, t2d):
    # (N, C, H, W) -> (C, N, H*W): channel on the leading (untiled) axis, spatial maps
    # lane-dense.  ~8 KB transpose in the wrapper; the output reshape is a bitcast.
    x_cnl = jnp.transpose(x.reshape(N, C, HW), (1, 0, 2))

    out = pl.pallas_call(
        spatial_attention_kernel,
        out_shape=jax.ShapeDtypeStruct((N, HW), jnp.float32),
        in_specs=[
            pl.BlockSpec(memory_space=pltpu.MemorySpace.VMEM),
            pl.BlockSpec(memory_space=pltpu.MemorySpace.VMEM),
        ],
        out_specs=pl.BlockSpec(memory_space=pltpu.MemorySpace.VMEM),
    )(x_cnl, t2d)

    return out.reshape(N, 1, H, W)


def spatial_attention_ref(x, w_dw, w_pw):
    """Pure-JAX reference following the PyTorch module exactly."""
    avg = jnp.mean(x, axis=1, keepdims=True)
    mx = jnp.max(x, axis=1, keepdims=True)
    xc = jnp.concatenate([avg, mx], axis=1)                    # (N, 2, H, W)
    y = lax.conv_general_dilated(
        xc, w_dw, window_strides=(1, 1), padding=[(PAD, PAD), (PAD, PAD)],
        dimension_numbers=("NCHW", "OIHW", "NCHW"),
        feature_group_count=2, precision=lax.Precision.HIGHEST)
    y = lax.conv_general_dilated(
        y, w_pw, window_strides=(1, 1), padding=[(0, 0), (0, 0)],
        dimension_numbers=("NCHW", "OIHW", "NCHW"),
        precision=lax.Precision.HIGHEST)
    return jax.nn.sigmoid(y)                                   # (N, 1, H, W)


if __name__ == "__main__":
    key = jax.random.PRNGKey(0)
    kx, kd, kp = jax.random.split(key, 3)

    x = jax.random.normal(kx, (N, C, H, W), jnp.float32)
    # conv1: Conv2d(2, 2, 7, padding=3, bias=False, groups=2) -> weight (2, 1, 7, 7)
    w_dw = 0.3 * jax.random.normal(kd, (2, 1, K, K), jnp.float32)
    # pointwise: Conv2d(2, 1, 1, bias=False)                  -> weight (1, 2, 1, 1)
    w_pw = 0.7 * jax.random.normal(kp, (1, 2, 1, 1), jnp.float32)

    # Weight folding hoisted out of the per-call path (weights are static across calls).
    t2d = jax.block_until_ready(build_packed_weight(w_dw, w_pw))   # (2*HW, HW)

    out = spatial_attention_pallas(x, t2d)
    out = jax.block_until_ready(out)

    ref = spatial_attention_ref(x, w_dw, w_pw)
    assert out.shape == (N, 1, H, W)
    assert jnp.allclose(out, ref, atol=1e-4, rtol=1e-4), "mismatch vs JAX reference"

    print("KERNEL_OK")
</pallas_src>

<mosaic_0001>
module attributes {stable_mosaic.version = 11 : i64} {
  func.func @spatial_attention_kernel(%arg0: memref<4x2x256xf32, #tpu.memory_space<vmem>>, %arg1: memref<512x256xf32, #tpu.memory_space<vmem>>, %arg2: memref<2x256xf32, #tpu.memory_space<vmem>>) attributes {dimension_semantics = [], scalar_prefetch = 0 : i64, scratch_operands = 0 : i64, tpu.core_type = #tpu.core_type<tc>} {
    %c0 = arith.constant 0 : index
    %c0_0 = arith.constant 0 : index
    %c0_1 = arith.constant 0 : index
    %0 = vector.load %arg0[%c0, %c0_0, %c0_1] : memref<4x2x256xf32, #tpu.memory_space<vmem>>, vector<4x2x256xf32>
    %1 = vector.extract_strided_slice %0 {offsets = [0, 0, 0], sizes = [1, 2, 256], strides = [1, 1, 1]} : vector<4x2x256xf32> to vector<1x2x256xf32>
    %2 = vector.shape_cast %1 : vector<1x2x256xf32> to vector<2x256xf32>
    %3 = vector.extract_strided_slice %0 {offsets = [0, 0, 0], sizes = [1, 2, 256], strides = [1, 1, 1]} : vector<4x2x256xf32> to vector<1x2x256xf32>
    %4 = vector.shape_cast %3 : vector<1x2x256xf32> to vector<2x256xf32>
    %5 = vector.extract_strided_slice %0 {offsets = [1, 0, 0], sizes = [1, 2, 256], strides = [1, 1, 1]} : vector<4x2x256xf32> to vector<1x2x256xf32>
    %6 = vector.shape_cast %5 : vector<1x2x256xf32> to vector<2x256xf32>
    %7 = arith.addf %2, %6 : vector<2x256xf32>
    %8 = vector.extract_strided_slice %0 {offsets = [1, 0, 0], sizes = [1, 2, 256], strides = [1, 1, 1]} : vector<4x2x256xf32> to vector<1x2x256xf32>
    %9 = vector.shape_cast %8 : vector<1x2x256xf32> to vector<2x256xf32>
    %10 = arith.maximumf %4, %9 : vector<2x256xf32>
    %11 = vector.extract_strided_slice %0 {offsets = [2, 0, 0], sizes = [1, 2, 256], strides = [1, 1, 1]} : vector<4x2x256xf32> to vector<1x2x256xf32>
    %12 = vector.shape_cast %11 : vector<1x2x256xf32> to vector<2x256xf32>
    %13 = arith.addf %7, %12 : vector<2x256xf32>
    %14 = vector.extract_strided_slice %0 {offsets = [2, 0, 0], sizes = [1, 2, 256], strides = [1, 1, 1]} : vector<4x2x256xf32> to vector<1x2x256xf32>
    %15 = vector.shape_cast %14 : vector<1x2x256xf32> to vector<2x256xf32>
    %16 = arith.maximumf %10, %15 : vector<2x256xf32>
    %17 = vector.extract_strided_slice %0 {offsets = [3, 0, 0], sizes = [1, 2, 256], strides = [1, 1, 1]} : vector<4x2x256xf32> to vector<1x2x256xf32>
    %18 = vector.shape_cast %17 : vector<1x2x256xf32> to vector<2x256xf32>
    %19 = arith.addf %13, %18 : vector<2x256xf32>
    %20 = vector.extract_strided_slice %0 {offsets = [3, 0, 0], sizes = [1, 2, 256], strides = [1, 1, 1]} : vector<4x2x256xf32> to vector<1x2x256xf32>
    %21 = vector.shape_cast %20 : vector<1x2x256xf32> to vector<2x256xf32>
    %22 = arith.maximumf %16, %21 : vector<2x256xf32>
    %23 = tpu.concatenate %19, %22 in 1 : vector<2x256xf32>, vector<2x256xf32> -> vector<2x512xf32>
    %c0_2 = arith.constant 0 : index
    %c0_3 = arith.constant 0 : index
    %24 = vector.load %arg1[%c0_2, %c0_3] : memref<512x256xf32, #tpu.memory_space<vmem>>, vector<512x256xf32>
    %cst = arith.constant dense<0.000000e+00> : vector<2x256xf32>
    %25 = tpu.matmul %23, %24, %cst {dimension_numbers = #tpu.dot_dimension_numbers<[1], [0], [0], [1], [0, 0, 1, 1], [], []>} : vector<2x512xf32>, vector<512x256xf32>, vector<2x256xf32> -> vector<2x256xf32>
    %cst_4 = arith.constant 0.000000e+00 : f32
    %26 = vector.broadcast %cst_4 : f32 to vector<2x256xf32>
    %27 = arith.subf %26, %25 : vector<2x256xf32>
    %28 = math.exp %27 : vector<2x256xf32>
    %cst_5 = arith.constant 1.000000e+00 : f32
    %29 = vector.broadcast %cst_5 : f32 to vector<2x256xf32>
    %30 = arith.addf %29, %28 : vector<2x256xf32>
    %cst_6 = arith.constant 1.000000e+00 : f32
    %31 = vector.broadcast %cst_6 : f32 to vector<2x256xf32>
    %32 = arith.divf %31, %30 : vector<2x256xf32>
    %c0_7 = arith.constant 0 : index
    %c0_8 = arith.constant 0 : index
    %33 = vector.load %arg2[%c0_7, %c0_8] : memref<2x256xf32, #tpu.memory_space<vmem>>, vector<2x256xf32>
    tpu.vector_store %arg2[%c0_7, %c0_8], %32 {strides = array<i32>} : memref<2x256xf32, #tpu.memory_space<vmem>>, vector<2x256xf32>,
    return
  }
}

</mosaic_0001>

<llo_original>
// kernel: spatial_attention_pallas.1
$region0: #{spatial_attention_pallas.1}
  #allocation0 [shape = 'u32[]', space=smem, size = 0x4, offset = 0x4, fixed_abs, tag = 'smem constant byte address 0x4 - core index']
  #allocation1 [shape = 'u32[72,128]{1,0:T(1,128)}', space=vmem, size = 0x9000, scoped, tag = 'internal scratch']
  %s0 = inlined_call_operand.vmem [shape: f32[4,2,256], index: 0, kind: input, shape index: {}]
  %s1 = inlined_call_operand.hbm [shape: f32[512,256], index: 1, kind: input, shape index: {}]
  %s2 = inlined_call_operand.vmem [shape: f32[2,256], index: 2, kind: output, shape index: {}]
  %s3 = sld [smem:[#allocation0]]
  $region22: #{spatial_attention_pallas.1} parent=0
    _
  %s5 = ssub.s32 1, %s3
  %s6 = scalar_select 0, %s5, %s3
  $region1: #{spatial_attention_pallas.1} parent=0
    #allocation2 [shape = 'u8[524288]{0}', space=vmem, size = 0x80000, scoped, tag = 'input window, operand 1, single buffered']
    #allocation3 [shape = 's32[1]{0}', space=sflag, size = 0x4, scoped, tag = 'scoped memory for spatial_attention_pallas.1']
    %7 = vsyncpa [#allocation3], 0
    // Predicated region
    $region2: #{spatial_attention_pallas.1} parent=1 // pred_check
      _
    $region3: #{spatial_attention_pallas.1} parent=1 // pred_check_branch
      %9 = sbr.rel (0) target = $region5
    $region4: #{spatial_attention_pallas.1} parent=1 // pred_region
      _
    $region5: #{spatial_attention_pallas.1} parent=1 // pred_fallthru
      _
    // Predicated region
    $region6: #{spatial_attention_pallas.1} parent=1 // pred_check
      _
    $region7: #{spatial_attention_pallas.1} parent=1 // pred_check_branch
      %11 = sbr.rel (0) target = $region9
    $region8: #{spatial_attention_pallas.1} parent=1 // pred_region
      %13 = vsyncadd [#allocation3], 0
      %s14 = sshll.u32 %s1, 4
      %s15 = int_to_ptr.hbm [resolvable:$true] %s14
      %s16 = sshll.u32 [#allocation2], 4
      %s17 = int_to_ptr.vmem [resolvable:$true] %s16
      %22 = dma.hbm_to_vmem [thread:$0]  %s15, 16384, %s17, [#allocation3], 256, 256, 16
    $region9: #{spatial_attention_pallas.1} parent=1 // pred_fallthru
      _
    // Predicated region
    $region10: #{spatial_attention_pallas.1} parent=1 // pred_check
      _
    $region11: #{spatial_attention_pallas.1} parent=1 // pred_check_branch
      %24 = sbr.rel (0) target = $region13
    $region12: #{spatial_attention_pallas.1} parent=1 // pred_region
      %26 = dma.done [#allocation3], 16384
    $region13: #{spatial_attention_pallas.1} parent=1 // pred_fallthru
      _
    %v27 = vld [vmem:[%s0] sm:$0xf]
    %v28 = vld [vmem:[%s0 + $0x4] sm:$0xf]
    %v29 = vld [vmem:[%s0 + $0x8] sm:$0xf]
    %v30 = vld [vmem:[%s0 + $0xc] sm:$0xf]
    %v31 = vadd.f32 %v27, %v28
    %v32 = vmax.f32 %v27, %v28
    %v33 = vadd.f32 %v31, %v29
    %v34 = vmax.f32 %v32, %v29
    %v35 = vadd.f32 %v33, %v30
    %v36 = vmax.f32 %v34, %v30
    %38 = vst [vmem:[#allocation1] ss:$4 sm:$0xff] %v35
    %v39 = vld.sshfl [vmem:[#allocation1] sm:$0xff pattern:$0x73625140]
    %v40 = vld.sshfl [vmem:[#allocation1 + $0x8] sm:$0xff pattern:$0x73625140]
    %44 = vst [vmem:[#allocation1] ss:$4 sm:$0xff] %v36
    %v45 = vld.sshfl [vmem:[#allocation1] sm:$0xff pattern:$0x73625140]
    %v46 = vld.sshfl [vmem:[#allocation1 + $0x8] sm:$0xff pattern:$0x73625140]
    %v49 = vld [vmem:[#allocation2] sm:$0xff]
    %v50 = vld [vmem:[#allocation2 + $0x8] sm:$0xff]
    %v51 = vld [vmem:[#allocation2 + $0x10] sm:$0xff]
    %v52 = vld [vmem:[#allocation2 + $0x18] sm:$0xff]
    %v53 = vld [vmem:[#allocation2 + $0x20] sm:$0xff]
    %v54 = vld [vmem:[#allocation2 + $0x28] sm:$0xff]
    %v55 = vld [vmem:[#allocation2 + $0x30] sm:$0xff]
    %v56 = vld [vmem:[#allocation2 + $0x38] sm:$0xff]
    %v57 = vld [vmem:[#allocation2 + $0x40] sm:$0xff]
    %v58 = vld [vmem:[#allocation2 + $0x48] sm:$0xff]
    %v59 = vld [vmem:[#allocation2 + $0x50] sm:$0xff]
    %v60 = vld [vmem:[#allocation2 + $0x58] sm:$0xff]
    %v61 = vld [vmem:[#allocation2 + $0x60] sm:$0xff]
    %v62 = vld [vmem:[#allocation2 + $0x68] sm:$0xff]
    %v63 = vld [vmem:[#allocation2 + $0x70] sm:$0xff]
    %v64 = vld [vmem:[#allocation2 + $0x78] sm:$0xff]
    %v65 = vld [vmem:[#allocation2 + $0x80] sm:$0xff]
    %v66 = vld [vmem:[#allocation2 + $0x88] sm:$0xff]
    %v67 = vld [vmem:[#allocation2 + $0x90] sm:$0xff]
    %v68 = vld [vmem:[#allocation2 + $0x98] sm:$0xff]
    %v69 = vld [vmem:[#allocation2 + $0xa0] sm:$0xff]
    %v70 = vld [vmem:[#allocation2 + $0xa8] sm:$0xff]
    %v71 = vld [vmem:[#allocation2 + $0xb0] sm:$0xff]
    %v72 = vld [vmem:[#allocation2 + $0xb8] sm:$0xff]
    %v73 = vld [vmem:[#allocation2 + $0xc0] sm:$0xff]
    %v74 = vld [vmem:[#allocation2 + $0xc8] sm:$0xff]
    %v75 = vld [vmem:[#allocation2 + $0xd0] sm:$0xff]
    %v76 = vld [vmem:[#allocation2 + $0xd8] sm:$0xff]
    %v77 = vld [vmem:[#allocation2 + $0xe0] sm:$0xff]
    %v78 = vld [vmem:[#allocation2 + $0xe8] sm:$0xff]
    %v79 = vld [vmem:[#allocation2 + $0xf0] sm:$0xff]
    %v80 = vld [vmem:[#allocation2 + $0xf8] sm:$0xff]
    %v81 = vld [vmem:[#allocation2 + $0x100] sm:$0xff]
    %v82 = vld [vmem:[#allocation2 + $0x108] sm:$0xff]
    %v83 = vld [vmem:[#allocation2 + $0x110] sm:$0xff]
    %v84 = vld [vmem:[#allocation2 + $0x118] sm:$0xff]
    %v85 = vld [vmem:[#allocation2 + $0x120] sm:$0xff]
    %v86 = vld [vmem:[#allocation2 + $0x128] sm:$0xff]
    %v87 = vld [vmem:[#allocation2 + $0x130] sm:$0xff]
    %v88 = vld [vmem:[#allocation2 + $0x138] sm:$0xff]
    %v89 = vld [vmem:[#allocation2 + $0x140] sm:$0xff]
    %v90 = vld [vmem:[#allocation2 + $0x148] sm:$0xff]
    %v91 = vld [vmem:[#allocation2 + $0x150] sm:$0xff]
    %v92 = vld [vmem:[#allocation2 + $0x158] sm:$0xff]
    %v93 = vld [vmem:[#allocation2 + $0x160] sm:$0xff]
    %v94 = vld [vmem:[#allocation2 + $0x168] sm:$0xff]
    %v95 = vld [vmem:[#allocation2 + $0x170] sm:$0xff]
    %v96 = vld [vmem:[#allocation2 + $0x178] sm:$0xff]
    %v97 = vld [vmem:[#allocation2 + $0x180] sm:$0xff]
    %v98 = vld [vmem:[#allocation2 + $0x188] sm:$0xff]
    %v99 = vld [vmem:[#allocation2 + $0x190] sm:$0xff]
    %v100 = vld [vmem:[#allocation2 + $0x198] sm:$0xff]
    %v101 = vld [vmem:[#allocation2 + $0x1a0] sm:$0xff]
    %v102 = vld [vmem:[#allocation2 + $0x1a8] sm:$0xff]
    %v103 = vld [vmem:[#allocation2 + $0x1b0] sm:$0xff]
    %v104 = vld [vmem:[#allocation2 + $0x1b8] sm:$0xff]
    %v105 = vld [vmem:[#allocation2 + $0x1c0] sm:$0xff]
    %v106 = vld [vmem:[#allocation2 + $0x1c8] sm:$0xff]
    %v107 = vld [vmem:[#allocation2 + $0x1d0] sm:$0xff]
    %v108 = vld [vmem:[#allocation2 + $0x1d8] sm:$0xff]
    %v109 = vld [vmem:[#allocation2 + $0x1e0] sm:$0xff]
    %v110 = vld [vmem:[#allocation2 + $0x1e8] sm:$0xff]
    %v111 = vld [vmem:[#allocation2 + $0x1f0] sm:$0xff]
    %v112 = vld [vmem:[#allocation2 + $0x1f8] sm:$0xff]
    %v113 = vld [vmem:[#allocation2 + $0x200] sm:$0xff]
    %v114 = vld [vmem:[#allocation2 + $0x208] sm:$0xff]
    %v115 = vld [vmem:[#allocation2 + $0x210] sm:$0xff]
    %v116 = vld [vmem:[#allocation2 + $0x218] sm:$0xff]
    %v117 = vld [vmem:[#allocation2 + $0x220] sm:$0xff]
    %v118 = vld [vmem:[#allocation2 + $0x228] sm:$0xff]
    %v119 = vld [vmem:[#allocation2 + $0x230] sm:$0xff]
    %v120 = vld [vmem:[#allocation2 + $0x238] sm:$0xff]
    %v121 = vld [vmem:[#allocation2 + $0x240] sm:$0xff]
    %v122 = vld [vmem:[#allocation2 + $0x248] sm:$0xff]
    %v123 = vld [vmem:[#allocation2 + $0x250] sm:$0xff]
    %v124 = vld [vmem:[#allocation2 + $0x258] sm:$0xff]
    %v125 = vld [vmem:[#allocation2 + $0x260] sm:$0xff]
    %v126 = vld [vmem:[#allocation2 + $0x268] sm:$0xff]
    %v127 = vld [vmem:[#allocation2 + $0x270] sm:$0xff]
    %v128 = vld [vmem:[#allocation2 + $0x278] sm:$0xff]
    %v129 = vld [vmem:[#allocation2 + $0x280] sm:$0xff]
    %v130 = vld [vmem:[#allocation2 + $0x288] sm:$0xff]
    %v131 = vld [vmem:[#allocation2 + $0x290] sm:$0xff]
    %v132 = vld [vmem:[#allocation2 + $0x298] sm:$0xff]
    %v133 = vld [vmem:[#allocation2 + $0x2a0] sm:$0xff]
    %v134 = vld [vmem:[#allocation2 + $0x2a8] sm:$0xff]
    %v135 = vld [vmem:[#allocation2 + $0x2b0] sm:$0xff]
    %v136 = vld [vmem:[#allocation2 + $0x2b8] sm:$0xff]
    %v137 = vld [vmem:[#allocation2 + $0x2c0] sm:$0xff]
    %v138 = vld [vmem:[#allocation2 + $0x2c8] sm:$0xff]
    %v139 = vld [vmem:[#allocation2 + $0x2d0] sm:$0xff]
    %v140 = vld [vmem:[#allocation2 + $0x2d8] sm:$0xff]
    %v141 = vld [vmem:[#allocation2 + $0x2e0] sm:$0xff]
    %v142 = vld [vmem:[#allocation2 + $0x2e8] sm:$0xff]
    %v143 = vld [vmem:[#allocation2 + $0x2f0] sm:$0xff]
    %v144 = vld [vmem:[#allocation2 + $0x2f8] sm:$0xff]
    %v145 = vld [vmem:[#allocation2 + $0x300] sm:$0xff]
    %v146 = vld [vmem:[#allocation2 + $0x308] sm:$0xff]
    %v147 = vld [vmem:[#allocation2 + $0x310] sm:$0xff]
    %v148 = vld [vmem:[#allocation2 + $0x318] sm:$0xff]
    %v149 = vld [vmem:[#allocation2 + $0x320] sm:$0xff]
    %v150 = vld [vmem:[#allocation2 + $0x328] sm:$0xff]
    %v151 = vld [vmem:[#allocation2 + $0x330] sm:$0xff]
    %v152 = vld [vmem:[#allocation2 + $0x338] sm:$0xff]
    %v153 = vld [vmem:[#allocation2 + $0x340] sm:$0xff]
    %v154 = vld [vmem:[#allocation2 + $0x348] sm:$0xff]
    %v155 = vld [vmem:[#allocation2 + $0x350] sm:$0xff]
    %v156 = vld [vmem:[#allocation2 + $0x358] sm:$0xff]
    %v157 = vld [vmem:[#allocation2 + $0x360] sm:$0xff]
    %v158 = vld [vmem:[#allocation2 + $0x368] sm:$0xff]
    %v159 = vld [vmem:[#allocation2 + $0x370] sm:$0xff]
    %v160 = vld [vmem:[#allocation2 + $0x378] sm:$0xff]
    %v161 = vld [vmem:[#allocation2 + $0x380] sm:$0xff]
    %v162 = vld [vmem:[#allocation2 + $0x388] sm:$0xff]
    %v163 = vld [vmem:[#allocation2 + $0x390] sm:$0xff]
    %v164 = vld [vmem:[#allocation2 + $0x398] sm:$0xff]
    %v165 = vld [vmem:[#allocation2 + $0x3a0] sm:$0xff]
    %v166 = vld [vmem:[#allocation2 + $0x3a8] sm:$0xff]
    %v167 = vld [vmem:[#allocation2 + $0x3b0] sm:$0xff]
    %v168 = vld [vmem:[#allocation2 + $0x3b8] sm:$0xff]
    %v169 = vld [vmem:[#allocation2 + $0x3c0] sm:$0xff]
    %v170 = vld [vmem:[#allocation2 + $0x3c8] sm:$0xff]
    %v171 = vld [vmem:[#allocation2 + $0x3d0] sm:$0xff]
    %v172 = vld [vmem:[#allocation2 + $0x3d8] sm:$0xff]
    %v173 = vld [vmem:[#allocation2 + $0x3e0] sm:$0xff]
    %v174 = vld [vmem:[#allocation2 + $0x3e8] sm:$0xff]
    %v175 = vld [vmem:[#allocation2 + $0x3f0] sm:$0xff]
    %v176 = vld [vmem:[#allocation2 + $0x3f8] sm:$0xff]
    %177 = vmatpush.msra.mxu0 %v79
    %178 = vmatpush.msra.mxu0 %v77
    %179 = vmatpush.msra.mxu0 %v75
    %180 = vmatpush.msra.mxu0 %v73
    %181 = vmatpush.msra.mxu0 %v71
    %182 = vmatpush.msra.mxu0 %v69
    %183 = vmatpush.msra.mxu0 %v67
    %184 = vmatpush.msra.mxu0 %v65
    %185 = vmatpush.msra.mxu0 %v63
    %186 = vmatpush.msra.mxu0 %v61
    %187 = vmatpush.msra.mxu0 %v59
    %188 = vmatpush.msra.mxu0 %v57
    %189 = vmatpush.msra.mxu0 %v55
    %190 = vmatpush.msra.mxu0 %v53
    %191 = vmatpush.msra.mxu0 %v51
    %192 = vmatpush.msra.mxu0 %v49
    %193 = vmatmul.f32.gmra.mxu0 %v39
    %v194 = vpop.f32.mrf.mxu0
    %v195 = vadd.f32 0.0, %v194
    %196 = vdwg.mxu0
    %197 = vmatpush.msra.mxu0 %v111
    %198 = vmatpush.msra.mxu0 %v109
    %199 = vmatpush.msra.mxu0 %v107
    %200 = vmatpush.msra.mxu0 %v105
    %201 = vmatpush.msra.mxu0 %v103
    %202 = vmatpush.msra.mxu0 %v101
    %203 = vmatpush.msra.mxu0 %v99
    %204 = vmatpush.msra.mxu0 %v97
    %205 = vmatpush.msra.mxu0 %v95
    %206 = vmatpush.msra.mxu0 %v93
    %207 = vmatpush.msra.mxu0 %v91
    %208 = vmatpush.msra.mxu0 %v89
    %209 = vmatpush.msra.mxu0 %v87
    %210 = vmatpush.msra.mxu0 %v85
    %211 = vmatpush.msra.mxu0 %v83
    %212 = vmatpush.msra.mxu0 %v81
    %213 = vmatmul.f32.gmra.mxu0 %v40
    %v214 = vpop.f32.mrf.mxu0
    %v215 = vadd.f32 %v195, %v214
    %216 = vdwg.mxu0
    %217 = vmatpush.msra.mxu0 %v143
    %218 = vmatpush.msra.mxu0 %v141
    %219 = vmatpush.msra.mxu0 %v139
    %220 = vmatpush.msra.mxu0 %v137
    %221 = vmatpush.msra.mxu0 %v135
    %222 = vmatpush.msra.mxu0 %v133
    %223 = vmatpush.msra.mxu0 %v131
    %224 = vmatpush.msra.mxu0 %v129
    %225 = vmatpush.msra.mxu0 %v127
    %226 = vmatpush.msra.mxu0 %v125
    %227 = vmatpush.msra.mxu0 %v123
    %228 = vmatpush.msra.mxu0 %v121
    %229 = vmatpush.msra.mxu0 %v119
    %230 = vmatpush.msra.mxu0 %v117
    %231 = vmatpush.msra.mxu0 %v115
    %232 = vmatpush.msra.mxu0 %v113
    %233 = vmatmul.f32.gmra.mxu0 %v45
    %v234 = vpop.f32.mrf.mxu0
    %v235 = vadd.f32 %v215, %v234
    %236 = vdwg.mxu0
    %237 = vmatpush.msra.mxu0 %v175
    %238 = vmatpush.msra.mxu0 %v173
    %239 = vmatpush.msra.mxu0 %v171
    %240 = vmatpush.msra.mxu0 %v169
    %241 = vmatpush.msra.mxu0 %v167
    %242 = vmatpush.msra.mxu0 %v165
    %243 = vmatpush.msra.mxu0 %v163
    %244 = vmatpush.msra.mxu0 %v161
    %245 = vmatpush.msra.mxu0 %v159
    %246 = vmatpush.msra.mxu0 %v157
    %247 = vmatpush.msra.mxu0 %v155
    %248 = vmatpush.msra.mxu0 %v153
    %249 = vmatpush.msra.mxu0 %v151
    %250 = vmatpush.msra.mxu0 %v149
    %251 = vmatpush.msra.mxu0 %v147
    %252 = vmatpush.msra.mxu0 %v145
    %253 = vmatmul.f32.gmra.mxu0 %v46
    %v254 = vpop.f32.mrf.mxu0
    %v255 = vadd.f32 %v235, %v254
    %256 = vdwg.mxu0
    %257 = vmatpush.msra.mxu0 %v80
    %258 = vmatpush.msra.mxu0 %v78
    %259 = vmatpush.msra.mxu0 %v76
    %260 = vmatpush.msra.mxu0 %v74
    %261 = vmatpush.msra.mxu0 %v72
    %262 = vmatpush.msra.mxu0 %v70
    %263 = vmatpush.msra.mxu0 %v68
    %264 = vmatpush.msra.mxu0 %v66
    %265 = vmatpush.msra.mxu0 %v64
    %266 = vmatpush.msra.mxu0 %v62
    %267 = vmatpush.msra.mxu0 %v60
    %268 = vmatpush.msra.mxu0 %v58
    %269 = vmatpush.msra.mxu0 %v56
    %270 = vmatpush.msra.mxu0 %v54
    %271 = vmatpush.msra.mxu0 %v52
    %272 = vmatpush.msra.mxu0 %v50
    %273 = vmatmul.f32.gmra.mxu0 %v39
    %v274 = vpop.f32.mrf.mxu0
    %v275 = vadd.f32 0.0, %v274
    %276 = vdwg.mxu0
    %277 = vmatpush.msra.mxu0 %v112
    %278 = vmatpush.msra.mxu0 %v110
    %279 = vmatpush.msra.mxu0 %v108
    %280 = vmatpush.msra.mxu0 %v106
    %281 = vmatpush.msra.mxu0 %v104
    %282 = vmatpush.msra.mxu0 %v102
    %283 = vmatpush.msra.mxu0 %v100
    %284 = vmatpush.msra.mxu0 %v98
    %285 = vmatpush.msra.mxu0 %v96
    %286 = vmatpush.msra.mxu0 %v94
    %287 = vmatpush.msra.mxu0 %v92
    %288 = vmatpush.msra.mxu0 %v90
    %289 = vmatpush.msra.mxu0 %v88
    %290 = vmatpush.msra.mxu0 %v86
    %291 = vmatpush.msra.mxu0 %v84
    %292 = vmatpush.msra.mxu0 %v82
    %293 = vmatmul.f32.gmra.mxu0 %v40
    %v294 = vpop.f32.mrf.mxu0
    %v295 = vadd.f32 %v275, %v294
    %296 = vdwg.mxu0
    %297 = vmatpush.msra.mxu0 %v144
    %298 = vmatpush.msra.mxu0 %v142
    %299 = vmatpush.msra.mxu0 %v140
    %300 = vmatpush.msra.mxu0 %v138
    %301 = vmatpush.msra.mxu0 %v136
    %302 = vmatpush.msra.mxu0 %v134
    %303 = vmatpush.msra.mxu0 %v132
    %304 = vmatpush.msra.mxu0 %v130
    %305 = vmatpush.msra.mxu0 %v128
    %306 = vmatpush.msra.mxu0 %v126
    %307 = vmatpush.msra.mxu0 %v124
    %308 = vmatpush.msra.mxu0 %v122
    %309 = vmatpush.msra.mxu0 %v120
    %310 = vmatpush.msra.mxu0 %v118
    %311 = vmatpush.msra.mxu0 %v116
    %312 = vmatpush.msra.mxu0 %v114
    %313 = vmatmul.f32.gmra.mxu0 %v45
    %v314 = vpop.f32.mrf.mxu0
    %v315 = vadd.f32 %v295, %v314
    %316 = vdwg.mxu0
    %317 = vmatpush.msra.mxu0 %v176
    %318 = vmatpush.msra.mxu0 %v174
    %319 = vmatpush.msra.mxu0 %v172
    %320 = vmatpush.msra.mxu0 %v170
    %321 = vmatpush.msra.mxu0 %v168
    %322 = vmatpush.msra.mxu0 %v166
    %323 = vmatpush.msra.mxu0 %v164
    %324 = vmatpush.msra.mxu0 %v162
    %325 = vmatpush.msra.mxu0 %v160
    %326 = vmatpush.msra.mxu0 %v158
    %327 = vmatpush.msra.mxu0 %v156
    %328 = vmatpush.msra.mxu0 %v154
    %329 = vmatpush.msra.mxu0 %v152
    %330 = vmatpush.msra.mxu0 %v150
    %331 = vmatpush.msra.mxu0 %v148
    %332 = vmatpush.msra.mxu0 %v146
    %333 = vmatmul.f32.gmra.mxu0 %v46
    %v334 = vpop.f32.mrf.mxu0
    %v335 = vadd.f32 %v315, %v334
    %336 = vdwg.mxu0
    %v337 = vsub.f32 0.0, %v255
    %v338 = vsub.f32 0.0, %v335
    %v339 = vmul.f32 %v337, 1.442695
    %v340 = vpow.pop %v339
    %v341 = vmul.f32 %v338, 1.442695
    %v342 = vpow.pop %v341
    %v343 = vadd.f32 %v340, 1.0
    %v344 = vadd.f32 %v342, 1.0
    %v345 = vrcp.pop %v343
    %v346 = vmul.f32 %v343, %v345
    %v347 = vsub.f32 1.0, %v346
    %v348 = vmul.f32 %v345, %v347
    %v349 = vadd.f32 %v345, %v348
    %vm350 = vweird.f32 %v343
    %vm351 = vweird.f32 %v345
    %vm352 = vmor %vm350, %vm351
    %v353 = vsel %vm352, %v345, %v349
    %v354 = vand.u32 2147483647, %v343
    %vm355 = vcmp.eq.f32.partialorder %v354, 8.507059e+37
    %v356 = vand.u32 %v343, 2147483648
    %v357 = vor.u32 1.1754944e-38, %v356
    %v358 = vsel %vm355, %v357, %v353
    %v359 = vmul.f32 1.0, %v358
    %v360 = vrcp.pop %v344
    %v361 = vmul.f32 %v344, %v360
    %v362 = vsub.f32 1.0, %v361
    %v363 = vmul.f32 %v360, %v362
    %v364 = vadd.f32 %v360, %v363
    %vm365 = vweird.f32 %v344
    %vm366 = vweird.f32 %v360
    %vm367 = vmor %vm365, %vm366
    %v368 = vsel %vm367, %v360, %v364
    %v369 = vand.u32 2147483647, %v344
    %vm370 = vcmp.eq.f32.partialorder %v369, 8.507059e+37
    %v371 = vand.u32 %v344, 2147483648
    %v372 = vor.u32 1.1754944e-38, %v371
    %v373 = vsel %vm370, %v372, %v368
    %v374 = vmul.f32 1.0, %v373
    %v377 = vrot.slane %v374, 6
    %vm378 = vcmask 1041408
    %v379 = vsel %vm378, %v359, %v377
    %381 = vst [vmem:[%s2] sm:$0xf] %v379
    // Predicated region
    $region14: #{spatial_attention_pallas.1} parent=1 // pred_check
      _
    $region15: #{spatial_attention_pallas.1} parent=1 // pred_check_branch
      %383 = sbr.rel (0) target = $region17
    $region16: #{spatial_attention_pallas.1} parent=1 // pred_region
      _
    $region17: #{spatial_attention_pallas.1} parent=1 // pred_fallthru
      _
    // Predicated region
    $region18: #{spatial_attention_pallas.1} parent=1 // pred_check
      _
    $region19: #{spatial_attention_pallas.1} parent=1 // pred_check_branch
      %385 = sbr.rel (0) target = $region21
    $region20: #{spatial_attention_pallas.1} parent=1 // pred_region
      _
    $region21: #{spatial_attention_pallas.1} parent=1 // pred_fallthru
      _
    %386 = vsyncpa [#allocation3], 1

</llo_original>
